<compile_context>
chip_gen: v7x
topology: tpu7x:2x2x1
jax: 0.10.0
libtpu: 0.0.40
codegen_flags: <defaults>
</compile_context>

<pallas_src>
import functools

import jax
import jax.numpy as jnp
from jax import lax
from jax.experimental import pallas as pl
from jax.experimental.pallas import tpu as pltpu


def _round_up(n, m):
    return (n + m - 1) // m * m


def critic_kernel(x_ref, slab_ref, o_ref, *, IN, H, R2, RP):
    eps = jnp.float32(1e-5)

    x = x_ref[0].astype(jnp.float32)                           # (B, IN)

    # ---- layer1 (bias folded away) + BN fused to one FMA + ReLU --------------
    h = jnp.dot(x, slab_ref[0:IN, :], preferred_element_type=jnp.float32)
    m = jnp.mean(h, axis=0, keepdims=True)
    v = jnp.mean((h - m) ** 2, axis=0, keepdims=True)          # two-pass variance
    scale = slab_ref[RP + 0:RP + 1, :] * lax.rsqrt(v + eps)    # gamma1  (rsqrt -> EUP)
    shift = slab_ref[RP + 1:RP + 2, :] - m * scale             # beta1
    h = jnp.maximum(h * scale + shift, 0.0)

    # ---- layer2 + BN + ReLU ---------------------------------------------------
    # w2 is zero-padded from (H, H//2) to (H, H); the padded columns stay exactly
    # zero through BN (gamma/beta padded with 0) and contribute nothing below.
    h = jnp.dot(h, slab_ref[R2:R2 + H, :], preferred_element_type=jnp.float32)
    m = jnp.mean(h, axis=0, keepdims=True)
    v = jnp.mean((h - m) ** 2, axis=0, keepdims=True)
    scale = slab_ref[RP + 2:RP + 3, :] * lax.rsqrt(v + eps)    # gamma2 (padded)
    shift = slab_ref[RP + 3:RP + 4, :] - m * scale             # beta2  (padded)
    h = jnp.maximum(h * scale + shift, 0.0)

    # ---- classifier: (1,H) x (B,H)^T -> (1,B), batch on the lane axis ---------
    w3 = slab_ref[RP + 4:RP + 5, :]                            # (1, H), zero-padded
    b3 = slab_ref[RP + 5:RP + 6, 0:1]                          # (1, 1)
    out = lax.dot_general(w3, h, (((1,), (1,)), ((), ())),
                          preferred_element_type=jnp.float32) + b3   # (1, B)
    o_ref[0, :, :] = out.astype(o_ref.dtype)


def critic_forward(x, slab, layout):
    """x: (NB, B, input_size) -> (NB, B, 1). One grid step per independent mini-batch."""
    IN, H, H2, R2, RP = layout
    NB, B, D = x.shape
    assert D == IN

    kernel = functools.partial(critic_kernel, IN=IN, H=H, R2=R2, RP=RP)

    cost = pl.CostEstimate(
        flops=int(NB * 2 * B * (IN * H + H * H + H)),
        transcendentals=int(NB * 2 * H),
        bytes_accessed=int(x.size * 4 + slab.size * 4 + NB * B * 4),
    )

    out = pl.pallas_call(
        kernel,
        out_shape=jax.ShapeDtypeStruct((NB, 1, B), jnp.float32),
        grid=(NB,),
        in_specs=[
            pl.BlockSpec((1, B, D), lambda nb: (nb, 0, 0)),
            pl.BlockSpec(slab.shape, lambda nb: (0, 0)),   # same block every step -> resident
        ],
        out_specs=pl.BlockSpec((1, 1, B), lambda nb: (nb, 0, 0)),
        compiler_params=pltpu.CompilerParams(dimension_semantics=("parallel",)),
        cost_estimate=cost,
    )(x, slab)
    return out.reshape(NB, B, 1)


def init_params(key, input_size, hidden_dim):
    """PyTorch-style init; returns the full (unpacked) parameter set."""
    h2 = hidden_dim // 2
    ks = jax.random.split(key, 6)

    def linear(kw, kb, fan_in, fan_out):
        bound = 1.0 / float(fan_in) ** 0.5
        w = jax.random.uniform(kw, (fan_in, fan_out), jnp.float32, -bound, bound)
        b = jax.random.uniform(kb, (1, fan_out), jnp.float32, -bound, bound)
        return w, b

    w1, b1 = linear(ks[0], ks[1], input_size, hidden_dim)
    w2, b2 = linear(ks[2], ks[3], hidden_dim, h2)
    w3, b3 = linear(ks[4], ks[5], h2, 1)

    g1 = jnp.ones((1, hidden_dim), jnp.float32)
    be1 = jnp.zeros((1, hidden_dim), jnp.float32)
    g2 = jnp.ones((1, h2), jnp.float32)
    be2 = jnp.zeros((1, h2), jnp.float32)

    return dict(w1=w1, b1=b1, g1=g1, be1=be1,
                w2=w2, b2=b2, g2=g2, be2=be2,
                w3=w3, b3=b3)


def pack_params(p):
    """Pack every parameter into one row-aligned f32 slab (columns = hidden_dim).

    Row layout (region starts are multiples of 8):
      [0,  IN)      : w1                       (IN, H)
      [R2, R2+H)    : w2 zero-padded to        (H,  H)
      RP+0 / RP+1   : gamma1 / beta1
      RP+2 / RP+3   : gamma2 / beta2  (zero-padded beyond H//2)
      RP+4          : w3 row           (zero-padded beyond H//2)
      RP+5          : b3 in column 0
    b1/b2 are intentionally excluded (cancelled by train-mode BN mean subtraction).
    """
    w1, w2, w3 = p["w1"], p["w2"], p["w3"]
    IN, H = w1.shape
    H2 = w2.shape[1]
    R2 = _round_up(IN, 8)
    RP = R2 + _round_up(H, 8)
    rows = _round_up(RP + 6, 8)

    slab = jnp.zeros((rows, H), jnp.float32)
    slab = slab.at[0:IN, :].set(w1)
    slab = slab.at[R2:R2 + H, 0:H2].set(w2)
    slab = slab.at[RP + 0, :].set(p["g1"][0])
    slab = slab.at[RP + 1, :].set(p["be1"][0])
    slab = slab.at[RP + 2, 0:H2].set(p["g2"][0])
    slab = slab.at[RP + 3, 0:H2].set(p["be2"][0])
    slab = slab.at[RP + 4, 0:H2].set(w3[:, 0])
    slab = slab.at[RP + 5, 0].set(p["b3"][0, 0])
    return slab, (IN, H, H2, R2, RP)


def reference_forward(x, p):
    """Pure-JAX reference matching PyTorch Critic.forward (train-mode BN)."""
    eps = 1e-5

    def bn(h, g, be):
        m = jnp.mean(h, axis=0, keepdims=True)
        v = jnp.mean((h - m) ** 2, axis=0, keepdims=True)
        return (h - m) / jnp.sqrt(v + eps) * g + be

    h = jnp.maximum(bn(x @ p["w1"] + p["b1"], p["g1"], p["be1"]), 0.0)
    h = jnp.maximum(bn(h @ p["w2"] + p["b2"], p["g2"], p["be2"]), 0.0)
    return h @ p["w3"] + p["b3"]


if __name__ == "__main__":
    key = jax.random.PRNGKey(0)
    k_x, k_p = jax.random.split(key)

    n_batches, batch, input_size, hidden_dim = 4, 8, 32, 64
    x = jax.random.normal(k_x, (n_batches, batch, input_size), jnp.float32)

    params = init_params(k_p, input_size, hidden_dim)
    slab, layout = pack_params(params)

    out = critic_forward(x, slab, layout)
    out = jax.block_until_ready(out)

    ref = jax.vmap(lambda xb: reference_forward(xb, params))(x)   # (NB, B, 1)

    assert out.shape == (n_batches, batch, 1)
    assert jnp.allclose(out, ref, atol=1e-4, rtol=1e-4), (out, ref)

    print("KERNEL_OK")
</pallas_src>

<mosaic_0001>
module attributes {stable_mosaic.version = 11 : i64} {
  func.func @critic_kernel(%arg0: i32, %arg1: memref<1x8x32xf32, #tpu.memory_space<vmem>>, %arg2: memref<104x64xf32, #tpu.memory_space<vmem>>, %arg3: memref<1x1x8xf32, #tpu.memory_space<vmem>>) attributes {dimension_semantics = [#tpu.dimension_semantics<parallel>], iteration_bounds = array<i64: 4>, scalar_prefetch = 0 : i64, scratch_operands = 0 : i64, tpu.core_type = #tpu.core_type<tc>, window_params = [{transform_indices = @transform_0, window_bounds = array<i64: 1, 8, 32>}, {pipeline_mode = #tpu.pipeline_mode<synchronous>, transform_indices = @transform_1, window_bounds = array<i64: 104, 64>}, {transform_indices = @transform_2, window_bounds = array<i64: 1, 1, 8>}]} {
    %c0 = arith.constant 0 : index
    %c0_0 = arith.constant 0 : index
    %c0_1 = arith.constant 0 : index
    %0 = vector.load %arg1[%c0, %c0_0, %c0_1] : memref<1x8x32xf32, #tpu.memory_space<vmem>>, vector<1x8x32xf32>
    %1 = vector.shape_cast %0 : vector<1x8x32xf32> to vector<8x32xf32>
    %c0_2 = arith.constant 0 : index
    %c0_3 = arith.constant 0 : index
    %2 = vector.load %arg2[%c0_2, %c0_3] : memref<104x64xf32, #tpu.memory_space<vmem>>, vector<32x64xf32>
    %cst = arith.constant dense<0.000000e+00> : vector<8x64xf32>
    %3 = tpu.matmul %1, %2, %cst {dimension_numbers = #tpu.dot_dimension_numbers<[1], [0], [0], [1], [0, 0, 1, 1], [], []>} : vector<8x32xf32>, vector<32x64xf32>, vector<8x64xf32> -> vector<8x64xf32>
    %cst_4 = arith.constant dense<0.000000e+00> : vector<64xf32>
    %4 = vector.multi_reduction <add>, %3, %cst_4 [0] : vector<8x64xf32> to vector<64xf32>
    %5 = vector.shape_cast %4 : vector<64xf32> to vector<1x64xf32>
    %cst_5 = arith.constant 8.000000e+00 : f32
    %6 = vector.broadcast %cst_5 : f32 to vector<1x64xf32>
    %7 = arith.divf %5, %6 : vector<1x64xf32>
    %8 = vector.broadcast %7 : vector<1x64xf32> to vector<8x64xf32>
    %9 = arith.subf %3, %8 : vector<8x64xf32>
    %10 = arith.mulf %9, %9 : vector<8x64xf32>
    %cst_6 = arith.constant dense<0.000000e+00> : vector<64xf32>
    %11 = vector.multi_reduction <add>, %10, %cst_6 [0] : vector<8x64xf32> to vector<64xf32>
    %12 = vector.shape_cast %11 : vector<64xf32> to vector<1x64xf32>
    %cst_7 = arith.constant 8.000000e+00 : f32
    %13 = vector.broadcast %cst_7 : f32 to vector<1x64xf32>
    %14 = arith.divf %12, %13 : vector<1x64xf32>
    %c96 = arith.constant 96 : index
    %c0_8 = arith.constant 0 : index
    %15 = vector.load %arg2[%c96, %c0_8] : memref<104x64xf32, #tpu.memory_space<vmem>>, vector<1x64xf32>
    %cst_9 = arith.constant 9.99999974E-6 : f32
    %16 = vector.broadcast %cst_9 : f32 to vector<1x64xf32>
    %17 = arith.addf %14, %16 : vector<1x64xf32>
    %18 = math.rsqrt %17 : vector<1x64xf32>
    %19 = arith.mulf %15, %18 : vector<1x64xf32>
    %c97 = arith.constant 97 : index
    %c0_10 = arith.constant 0 : index
    %20 = vector.load %arg2[%c97, %c0_10] : memref<104x64xf32, #tpu.memory_space<vmem>>, vector<1x64xf32>
    %21 = arith.mulf %7, %19 : vector<1x64xf32>
    %22 = arith.subf %20, %21 : vector<1x64xf32>
    %23 = vector.broadcast %19 : vector<1x64xf32> to vector<8x64xf32>
    %24 = arith.mulf %3, %23 : vector<8x64xf32>
    %25 = vector.broadcast %22 : vector<1x64xf32> to vector<8x64xf32>
    %26 = arith.addf %24, %25 : vector<8x64xf32>
    %cst_11 = arith.constant 0.000000e+00 : f32
    %27 = vector.broadcast %cst_11 : f32 to vector<8x64xf32>
    %28 = arith.maximumf %26, %27 : vector<8x64xf32>
    %c32 = arith.constant 32 : index
    %c0_12 = arith.constant 0 : index
    %29 = vector.load %arg2[%c32, %c0_12] : memref<104x64xf32, #tpu.memory_space<vmem>>, vector<64x64xf32>
    %cst_13 = arith.constant dense<0.000000e+00> : vector<8x64xf32>
    %30 = tpu.matmul %28, %29, %cst_13 {dimension_numbers = #tpu.dot_dimension_numbers<[1], [0], [0], [1], [0, 0, 1, 1], [], []>} : vector<8x64xf32>, vector<64x64xf32>, vector<8x64xf32> -> vector<8x64xf32>
    %cst_14 = arith.constant dense<0.000000e+00> : vector<64xf32>
    %31 = vector.multi_reduction <add>, %30, %cst_14 [0] : vector<8x64xf32> to vector<64xf32>
    %32 = vector.shape_cast %31 : vector<64xf32> to vector<1x64xf32>
    %cst_15 = arith.constant 8.000000e+00 : f32
    %33 = vector.broadcast %cst_15 : f32 to vector<1x64xf32>
    %34 = arith.divf %32, %33 : vector<1x64xf32>
    %35 = vector.broadcast %34 : vector<1x64xf32> to vector<8x64xf32>
    %36 = arith.subf %30, %35 : vector<8x64xf32>
    %37 = arith.mulf %36, %36 : vector<8x64xf32>
    %cst_16 = arith.constant dense<0.000000e+00> : vector<64xf32>
    %38 = vector.multi_reduction <add>, %37, %cst_16 [0] : vector<8x64xf32> to vector<64xf32>
    %39 = vector.shape_cast %38 : vector<64xf32> to vector<1x64xf32>
    %cst_17 = arith.constant 8.000000e+00 : f32
    %40 = vector.broadcast %cst_17 : f32 to vector<1x64xf32>
    %41 = arith.divf %39, %40 : vector<1x64xf32>
    %c98 = arith.constant 98 : index
    %c0_18 = arith.constant 0 : index
    %42 = vector.load %arg2[%c98, %c0_18] : memref<104x64xf32, #tpu.memory_space<vmem>>, vector<1x64xf32>
    %cst_19 = arith.constant 9.99999974E-6 : f32
    %43 = vector.broadcast %cst_19 : f32 to vector<1x64xf32>
    %44 = arith.addf %41, %43 : vector<1x64xf32>
    %45 = math.rsqrt %44 : vector<1x64xf32>
    %46 = arith.mulf %42, %45 : vector<1x64xf32>
    %c99 = arith.constant 99 : index
    %c0_20 = arith.constant 0 : index
    %47 = vector.load %arg2[%c99, %c0_20] : memref<104x64xf32, #tpu.memory_space<vmem>>, vector<1x64xf32>
    %48 = arith.mulf %34, %46 : vector<1x64xf32>
    %49 = arith.subf %47, %48 : vector<1x64xf32>
    %50 = vector.broadcast %46 : vector<1x64xf32> to vector<8x64xf32>
    %51 = arith.mulf %30, %50 : vector<8x64xf32>
    %52 = vector.broadcast %49 : vector<1x64xf32> to vector<8x64xf32>
    %53 = arith.addf %51, %52 : vector<8x64xf32>
    %cst_21 = arith.constant 0.000000e+00 : f32
    %54 = vector.broadcast %cst_21 : f32 to vector<8x64xf32>
    %55 = arith.maximumf %53, %54 : vector<8x64xf32>
    %c100 = arith.constant 100 : index
    %c0_22 = arith.constant 0 : index
    %56 = vector.load %arg2[%c100, %c0_22] : memref<104x64xf32, #tpu.memory_space<vmem>>, vector<1x64xf32>
    %c101 = arith.constant 101 : index
    %c0_23 = arith.constant 0 : index
    %57 = vector.load %arg2[%c101, %c0_23] : memref<104x64xf32, #tpu.memory_space<vmem>>, vector<1x1xf32>
    %cst_24 = arith.constant dense<0.000000e+00> : vector<1x8xf32>
    %58 = tpu.matmul %56, %55, %cst_24 {dimension_numbers = #tpu.dot_dimension_numbers<[1], [1], [0], [0], [0, 0, 1, 0], [], []>} : vector<1x64xf32>, vector<8x64xf32>, vector<1x8xf32> -> vector<1x8xf32>
    %59 = vector.broadcast %57 : vector<1x1xf32> to vector<1x8xf32>
    %60 = arith.addf %58, %59 : vector<1x8xf32>
    %c0_25 = arith.constant 0 : index
    %c0_26 = arith.constant 0 : index
    %c0_27 = arith.constant 0 : index
    %61 = vector.load %arg3[%c0_25, %c0_26, %c0_27] : memref<1x1x8xf32, #tpu.memory_space<vmem>>, vector<1x1x8xf32>
    %62 = vector.shape_cast %61 : vector<1x1x8xf32> to vector<1x8xf32>
    %63 = vector.shape_cast %60 : vector<1x8xf32> to vector<1x1x8xf32>
    tpu.vector_store %arg3[%c0_25, %c0_26, %c0_27], %63 {strides = array<i32>} : memref<1x1x8xf32, #tpu.memory_space<vmem>>, vector<1x1x8xf32>,
    return
  }
  func.func @transform_0(%arg0: i32) -> (i32, i32, i32) {
    %c0_i32 = arith.constant 0 : i32
    %c0_i32_0 = arith.constant 0 : i32
    %c0_i32_1 = arith.constant 0 : i32
    return %arg0, %c0_i32, %c0_i32_0 : i32, i32, i32
  }
  func.func @transform_1(%arg0: i32) -> (i32, i32) {
    %c0_i32 = arith.constant 0 : i32
    %c0_i32_0 = arith.constant 0 : i32
    %c0_i32_1 = arith.constant 0 : i32
    return %c0_i32, %c0_i32_0 : i32, i32
  }
  func.func @transform_2(%arg0: i32) -> (i32, i32, i32) {
    %c0_i32 = arith.constant 0 : i32
    %c0_i32_0 = arith.constant 0 : i32
    %c0_i32_1 = arith.constant 0 : i32
    return %arg0, %c0_i32, %c0_i32_0 : i32, i32, i32
  }
}

</mosaic_0001>

<llo_original>
// kernel: tpu_custom_call.1
$region0: #{tpu_custom_call.1}
  #allocation0 [shape = 'u32[]', space=smem, size = 0x4, offset = 0x4, fixed_abs, tag = 'smem constant byte address 0x4 - core index']
  #allocation1 [shape = 'u32[144,128]{1,0:T(1,128)}', space=vmem, size = 0x12000, scoped, tag = 'internal scratch']
  %s0 = inlined_call_operand.vmem [shape: f32[4,8,32], index: 0, kind: input, shape index: {}]
  %s1 = inlined_call_operand.vmem [shape: f32[104,64], index: 1, kind: input, shape index: {}]
  %s2 = inlined_call_operand.hbm [shape: f32[4,1,8], index: 2, kind: output, shape index: {}]
  %s3 = sld [smem:[#allocation0]]
  $region41: #{tpu_custom_call.1} parent=0
    _
  %s5 = ssub.s32 1, %s3
  %s6 = scalar_select 0, %s5, %s3
  $region1: #{tpu_custom_call.1} parent=0
    #allocation2 [shape = 'u8[1024]{0}', space=vmem, size = 0x400, scoped, tag = 'output window, operand 0']
    #allocation3 [shape = 's32[2]{0}', space=sflag, size = 0x8, scoped, tag = 'scoped memory for tpu_custom_call.1']
    %7 = vsyncpa [#allocation3], 0
    %s8 = scalar_lea.sflag [#allocation3], 1
    %9 = vsyncpa %s8, 0
    loop: start=0, step=1, limit=6
    $region2: #{tpu_custom_call.1} parent=1 // loop_pre_header
      _
    $region3: #{tpu_custom_call.1} parent=1 // loop_header
      %s11 = sphi 0, %s15
      %p12 = scmp.ge.s32.totalorder %s11, 6
      %s21 = sphi 0, %s23
      %s24 = sphi 0, %s21
      %s25 = sphi 0, %s24
      %s41 = sphi 0, %s25
      %s45 = sphi 0, %s45
      %s47 = sphi 0, %s45
      %s48 = sphi 0, %s47
      %s62 = sphi 0, %s48
      %s68 = sphi 0, %s70
      %s71 = sphi 0, %s68
      %s72 = sphi 0, %s71
      %s88 = sphi 0, %s72
    $region4: #{tpu_custom_call.1} parent=1 // loop_header_branch
      %14 = sbr.rel (%p12) target = $region8
    $region5: #{tpu_custom_call.1} parent=1 // loop_body
      %s16 = ssub.s32 %s11, 1
      %s17 = ssub.s32 %s11, 2
      %s18 = sadd.s32 %s11, 1
      %s19 = ssub.s32 %s11, %s18
      %p20 = scmp.eq.s32.totalorder %s19, 0
      %s22 = sadd.s32 %s21, 1
      %s23 = scalar_select %p20, %s21, %s22
      %p26 = pneg %p20
      %p27 = scmp.eq.s32.totalorder %s11, 3
      %p28 = por %p26, %p27
      %p29 = scmp.ne.s32.totalorder %s21, %s24
      %p30 = scmp.eq.s32.totalorder %s11, 0
      %p31 = por %p29, %p30
      %p32 = scmp.ne.s32.totalorder %s21, %s24
      %p33 = scmp.eq.s32.totalorder %s16, 3
      %p34 = por %p32, %p33
      %p35 = scmp.ne.s32.totalorder %s24, %s25
      %p36 = scmp.eq.s32.totalorder %s16, 0
      %p37 = por %p35, %p36
      %p38 = scmp.ne.s32.totalorder %s24, %s25
      %p39 = scmp.eq.s32.totalorder %s17, 3
      %p40 = por %p38, %p39
      %p42 = scmp.ne.s32.totalorder %s25, %s41
      %p43 = scmp.eq.s32.totalorder %s17, 0
      %p44 = por %p42, %p43
      %s46 = sadd.s32 %s45, 1
      %p49 = scmp.eq.s32.totalorder %s11, 3
      %p50 = scmp.ne.s32.totalorder %s45, %s47
      %p51 = scmp.eq.s32.totalorder %s11, 0
      %p52 = por %p50, %p51
      %p53 = scmp.ne.s32.totalorder %s45, %s47
      %p54 = scmp.eq.s32.totalorder %s16, 3
      %p55 = por %p53, %p54
      %p56 = scmp.ne.s32.totalorder %s47, %s48
      %p57 = scmp.eq.s32.totalorder %s16, 0
      %p58 = por %p56, %p57
      %p59 = scmp.ne.s32.totalorder %s47, %s48
      %p60 = scmp.eq.s32.totalorder %s17, 3
      %p61 = por %p59, %p60
      %p63 = scmp.ne.s32.totalorder %s48, %s62
      %p64 = scmp.eq.s32.totalorder %s17, 0
      %p65 = por %p63, %p64
      %s66 = ssub.s32 %s11, %s18
      %p67 = scmp.eq.s32.totalorder %s66, 0
      %s69 = sadd.s32 %s68, 1
      %s70 = scalar_select %p67, %s68, %s69
      %p73 = pneg %p67
      %p74 = scmp.eq.s32.totalorder %s11, 3
      %p75 = por %p73, %p74
      %p76 = scmp.ne.s32.totalorder %s68, %s71
      %p77 = scmp.eq.s32.totalorder %s11, 0
      %p78 = por %p76, %p77
      %p79 = scmp.ne.s32.totalorder %s68, %s71
      %p80 = scmp.eq.s32.totalorder %s16, 3
      %p81 = por %p79, %p80
      %p82 = scmp.ne.s32.totalorder %s71, %s72
      %p83 = scmp.eq.s32.totalorder %s16, 0
      %p84 = por %p82, %p83
      %p85 = scmp.ne.s32.totalorder %s71, %s72
      %p86 = scmp.eq.s32.totalorder %s17, 3
      %p87 = por %p85, %p86
      %p89 = scmp.ne.s32.totalorder %s72, %s88
      %p90 = scmp.eq.s32.totalorder %s17, 0
      %p91 = por %p89, %p90
      %p92 = scmp.le.s32.totalorder 1, %s11
      %p93 = scmp.lt.s32.totalorder %s11, 5
      %p94 = pnand %p92, %p93
      %p95 = pneg %p94
      // Predicated region
      $region9: #{tpu_custom_call.1} parent=5 // pred_check
        _
      $region10: #{tpu_custom_call.1} parent=5 // pred_check_branch
        %97 = sbr.rel (%p94) target = $region12
      $region11: #{tpu_custom_call.1} parent=5 // pred_region
        %s98 = ssub.s32 %s11, 1
        // Predicated region
        $region13: #{tpu_custom_call.1} parent=11 // pred_check
          %p99 = pneg %p58
        $region14: #{tpu_custom_call.1} parent=11 // pred_check_branch
          %101 = sbr.rel (%p99) target = $region16
        $region15: #{tpu_custom_call.1} parent=11 // pred_region
          _
        $region16: #{tpu_custom_call.1} parent=11 // pred_fallthru
          _
      $region12: #{tpu_custom_call.1} parent=5 // pred_fallthru
        _
      %p102 = scmp.lt.s32.totalorder %s11, 4
      // Predicated region
      $region17: #{tpu_custom_call.1} parent=5 // pred_check
        %p103 = pneg %p102
      $region18: #{tpu_custom_call.1} parent=5 // pred_check_branch
        %105 = sbr.rel (%p103) target = $region20
      $region19: #{tpu_custom_call.1} parent=5 // pred_region
        // Predicated region
        $region21: #{tpu_custom_call.1} parent=19 // pred_check
          %p106 = pneg %p31
        $region22: #{tpu_custom_call.1} parent=19 // pred_check_branch
          %108 = sbr.rel (%p106) target = $region24
        $region23: #{tpu_custom_call.1} parent=19 // pred_region
          %p109 = scmp.lt.s32.totalorder %s11, 3
          %s110 = scalar_select %p109, %s11, 3
          %s111 = smul.addr %s110, 8
          %s112 = scalar_lea.vmem %s0, %s111
        $region24: #{tpu_custom_call.1} parent=19 // pred_fallthru
          _
      $region20: #{tpu_custom_call.1} parent=5 // pred_fallthru
        _
      %p113 = scmp.le.s32.totalorder 1, %s11
      %p114 = scmp.lt.s32.totalorder %s11, 5
      %p115 = pnand %p113, %p114
      %p116 = pneg %p115
      // Predicated region
      $region25: #{tpu_custom_call.1} parent=5 // pred_check
        _
      $region26: #{tpu_custom_call.1} parent=5 // pred_check_branch
        %118 = sbr.rel (%p115) target = $region28
      $region27: #{tpu_custom_call.1} parent=5 // pred_region
        %s119 = ssub.s32 %s11, 1
        %p120 = scmp.lt.s32.totalorder %s16, 3
        %s121 = scalar_select %p120, %s16, 3
        %s122 = smul.addr %s121, 8
        %s123 = scalar_lea.vmem %s0, %s122
        %p124 = pneg %p37
        %p125 = pneg %p34
        %p126 = pneg %p58
        %p127 = pneg %p55
        %p128 = pneg %p84
        %p129 = pneg %p81
        %s130 = sand.u32 %s71, 1
        %s131 = scalar_lea.sflag [#allocation3], %s130
        %s132 = sand.u32 %s71, 1
        %s133 = scalar_lea.vmem [#allocation2], %s132
        %p134 = scmp.lt.s32.totalorder %s16, 3
        %s135 = scalar_select %p134, %s16, 3
        %s136 = smul.addr %s135, 8
        %s137 = scalar_lea.vmem %s0, %s136
        %v138 = vld [vmem:[%s137] sm:$0xff]
        %v139 = vld [vmem:[%s1] sm:$0xff]
        %v140 = vld [vmem:[%s1 + $0x8] sm:$0xff]
        %v141 = vld [vmem:[%s1 + $0x10] sm:$0xff]
        %v142 = vld [vmem:[%s1 + $0x18] sm:$0xff]
        %vm143 = vcmask 261120
        %v145 = vsel %vm143, %v138, 0
        %147 = vmatprep.subr.mxu0 0.0
        %148 = vmatpush1.msra.mxu0 %v139
        %149 = vmatprep.subr.mxu0 0.0
        %150 = vmatpush1.msra.mxu0 %v140
        %151 = vmatprep.subr.mxu0 0.0
        %152 = vmatpush1.msra.mxu0 %v141
        %153 = vmatprep.subr.mxu0 0.0
        %154 = vmatpush1.msra.mxu0 %v142
        %155 = vmatprep.subr.mxu0 0.0
        %156 = vmatpush1.msra.mxu0 0.0
        %157 = vmatprep.subr.mxu0 0.0
        %158 = vmatpush1.msra.mxu0 0.0
        %159 = vmatprep.subr.mxu0 0.0
        %160 = vmatpush1.msra.mxu0 0.0
        %161 = vmatprep.subr.mxu0 0.0
        %162 = vmatpush1.msra.mxu0 0.0
        %163 = vmatprep.subr.mxu0 0.0
        %164 = vmatpush1.msra.mxu0 0.0
        %165 = vmatprep.subr.mxu0 0.0
        %166 = vmatpush1.msra.mxu0 0.0
        %167 = vmatprep.subr.mxu0 0.0
        %168 = vmatpush1.msra.mxu0 0.0
        %169 = vmatprep.subr.mxu0 0.0
        %170 = vmatpush1.msra.mxu0 0.0
        %171 = vmatprep.subr.mxu0 0.0
        %172 = vmatpush1.msra.mxu0 0.0
        %173 = vmatprep.subr.mxu0 0.0
        %174 = vmatpush1.msra.mxu0 0.0
        %175 = vmatprep.subr.mxu0 0.0
        %176 = vmatpush1.msra.mxu0 0.0
        %177 = vmatprep.subr.mxu0 0.0
        %178 = vmatpush1.msra.mxu0 0.0
        %179 = vmatprep.subr.mxu0 0.0
        %180 = vmatpush1.msra.mxu0 0.0
        %181 = vmatprep.subr.mxu0 0.0
        %182 = vmatpush1.msra.mxu0 0.0
        %183 = vmatprep.subr.mxu0 0.0
        %184 = vmatpush1.msra.mxu0 0.0
        %185 = vmatprep.subr.mxu0 0.0
        %186 = vmatpush1.msra.mxu0 0.0
        %187 = vmatprep.subr.mxu0 0.0
        %188 = vmatpush1.msra.mxu0 0.0
        %189 = vmatprep.subr.mxu0 0.0
        %190 = vmatpush1.msra.mxu0 0.0
        %191 = vmatprep.subr.mxu0 0.0
        %192 = vmatpush1.msra.mxu0 0.0
        %193 = vmatprep.subr.mxu0 0.0
        %194 = vmatpush1.msra.mxu0 0.0
        %195 = vmatprep.subr.mxu0 0.0
        %196 = vmatpush1.msra.mxu0 0.0
        %197 = vmatprep.subr.mxu0 0.0
        %198 = vmatpush1.msra.mxu0 0.0
        %199 = vmatprep.subr.mxu0 0.0
        %200 = vmatpush1.msra.mxu0 0.0
        %201 = vmatprep.subr.mxu0 0.0
        %202 = vmatpush1.msra.mxu0 0.0
        %203 = vmatprep.subr.mxu0 0.0
        %204 = vmatpush1.msra.mxu0 0.0
        %205 = vmatprep.subr.mxu0 0.0
        %206 = vmatpush1.msra.mxu0 0.0
        %207 = vmatprep.subr.mxu0 0.0
        %208 = vmatpush1.msra.mxu0 0.0
        %209 = vmatprep.subr.mxu0 0.0
        %210 = vmatpush1.msra.mxu0 0.0
        %211 = vmatprep.mubr.f32.mxu0 0.0
        %212 = vmatmul.mubr.f32.gmra.mrb[0].mxu0 %v145
        %v213 = vpop.f32.mrb[0].mxu0
        %v214 = vadd.f32 0.0, %v213
        %v215 = vpop.f32.mrb[0].mxu0
        %216 = vdwg.mxu0
        %vm217 = vcmask 523264
        %v218 = vsel %vm217, %v214, 0.0
        %v219 = vrot.slane %v218, 4
        %v220 = vadd.f32 %v218, %v219
        %v221 = vrot.slane %v220, 2
        %v222 = vadd.f32 %v220, %v221
        %v223 = vrot.slane %v222, 1
        %v224 = vadd.f32 %v222, %v223
        %v225 = vrcp.pop 8.0
        %v226 = vmul.f32 %v224, %v225
        %v227 = vsub.f32 %v214, %v226
        %v228 = vmul.f32 %v227, %v227
        %v229 = vsel %vm217, %v228, 0.0
        %v230 = vrot.slane %v229, 4
        %v231 = vadd.f32 %v229, %v230
        %v232 = vrot.slane %v231, 2
        %v233 = vadd.f32 %v231, %v232
        %v234 = vrot.slane %v233, 1
        %v235 = vadd.f32 %v233, %v234
        %v236 = vmul.f32 %v235, %v225
        %v237 = vld [vmem:[%s1 + $0x60] sm:$0x1]
        %v238 = vadd.f32 %v236, 1e-05
        %v239 = vrsqrt.pop %v238
        %v240 = vmul.f32 %v237, %v239
        %v241 = vld [vmem:[%s1 + $0x61] sm:$0x1]
        %v242 = vmul.f32 %v226, %v240
        %v243 = vsub.f32 %v241, %v242
        %v244 = vlaneseq
        %v245 = vshrl.u32 %v244, 7
        %v246 = vsub.s32 0, %v245
        %v247 = vrot.slane %v240, %v246
        %v248 = vmul.f32 %v214, %v247
        %v249 = vlaneseq
        %v250 = vshrl.u32 %v249, 7
        %v251 = vsub.s32 0, %v250
        %v252 = vrot.slane %v243, %v251
        %v253 = vadd.f32 %v248, %v252
        %v254 = vmax.f32 %v253, 0.0
        %v255 = vld [vmem:[%s1 + $0x20] sm:$0xff]
        %v256 = vld [vmem:[%s1 + $0x28] sm:$0xff]
        %v257 = vld [vmem:[%s1 + $0x30] sm:$0xff]
        %v258 = vld [vmem:[%s1 + $0x38] sm:$0xff]
        %v259 = vld [vmem:[%s1 + $0x40] sm:$0xff]
        %v260 = vld [vmem:[%s1 + $0x48] sm:$0xff]
        %v261 = vld [vmem:[%s1 + $0x50] sm:$0xff]
        %v262 = vld [vmem:[%s1 + $0x58] sm:$0xff]
        %v264 = vsel %vm217, %v254, 0
        %266 = vmatprep.subr.mxu0 0.0
        %267 = vmatpush1.msra.mxu0 %v255
        %268 = vmatprep.subr.mxu0 0.0
        %269 = vmatpush1.msra.mxu0 %v256
        %270 = vmatprep.subr.mxu0 0.0
        %271 = vmatpush1.msra.mxu0 %v257
        %272 = vmatprep.subr.mxu0 0.0
        %273 = vmatpush1.msra.mxu0 %v258
        %274 = vmatprep.subr.mxu0 0.0
        %275 = vmatpush1.msra.mxu0 %v259
        %276 = vmatprep.subr.mxu0 0.0
        %277 = vmatpush1.msra.mxu0 %v260
        %278 = vmatprep.subr.mxu0 0.0
        %279 = vmatpush1.msra.mxu0 %v261
        %280 = vmatprep.subr.mxu0 0.0
        %281 = vmatpush1.msra.mxu0 %v262
        %282 = vmatprep.subr.mxu0 0.0
        %283 = vmatpush1.msra.mxu0 0.0
        %284 = vmatprep.subr.mxu0 0.0
        %285 = vmatpush1.msra.mxu0 0.0
        %286 = vmatprep.subr.mxu0 0.0
        %287 = vmatpush1.msra.mxu0 0.0
        %288 = vmatprep.subr.mxu0 0.0
        %289 = vmatpush1.msra.mxu0 0.0
        %290 = vmatprep.subr.mxu0 0.0
        %291 = vmatpush1.msra.mxu0 0.0
        %292 = vmatprep.subr.mxu0 0.0
        %293 = vmatpush1.msra.mxu0 0.0
        %294 = vmatprep.subr.mxu0 0.0
        %295 = vmatpush1.msra.mxu0 0.0
        %296 = vmatprep.subr.mxu0 0.0
        %297 = vmatpush1.msra.mxu0 0.0
        %298 = vmatprep.subr.mxu0 0.0
        %299 = vmatpush1.msra.mxu0 0.0
        %300 = vmatprep.subr.mxu0 0.0
        %301 = vmatpush1.msra.mxu0 0.0
        %302 = vmatprep.subr.mxu0 0.0
        %303 = vmatpush1.msra.mxu0 0.0
        %304 = vmatprep.subr.mxu0 0.0
        %305 = vmatpush1.msra.mxu0 0.0
        %306 = vmatprep.subr.mxu0 0.0
        %307 = vmatpush1.msra.mxu0 0.0
        %308 = vmatprep.subr.mxu0 0.0
        %309 = vmatpush1.msra.mxu0 0.0
        %310 = vmatprep.subr.mxu0 0.0
        %311 = vmatpush1.msra.mxu0 0.0
        %312 = vmatprep.subr.mxu0 0.0
        %313 = vmatpush1.msra.mxu0 0.0
        %314 = vmatprep.subr.mxu0 0.0
        %315 = vmatpush1.msra.mxu0 0.0
        %316 = vmatprep.subr.mxu0 0.0
        %317 = vmatpush1.msra.mxu0 0.0
        %318 = vmatprep.subr.mxu0 0.0
        %319 = vmatpush1.msra.mxu0 0.0
        %320 = vmatprep.subr.mxu0 0.0
        %321 = vmatpush1.msra.mxu0 0.0
        %322 = vmatprep.subr.mxu0 0.0
        %323 = vmatpush1.msra.mxu0 0.0
        %324 = vmatprep.subr.mxu0 0.0
        %325 = vmatpush1.msra.mxu0 0.0
        %326 = vmatprep.subr.mxu0 0.0
        %327 = vmatpush1.msra.mxu0 0.0
        %328 = vmatprep.subr.mxu0 0.0
        %329 = vmatpush1.msra.mxu0 0.0
        %330 = vmatprep.mubr.f32.mxu0 0.0
        %331 = vmatmul.mubr.f32.gmra.mrb[0].mxu0 %v264
        %v332 = vpop.f32.mrb[0].mxu0
        %v333 = vadd.f32 0.0, %v332
        %v334 = vpop.f32.mrb[0].mxu0
        %335 = vdwg.mxu0
        %v336 = vsel %vm217, %v333, 0.0
        %v337 = vrot.slane %v336, 4
        %v338 = vadd.f32 %v336, %v337
        %v339 = vrot.slane %v338, 2
        %v340 = vadd.f32 %v338, %v339
        %v341 = vrot.slane %v340, 1
        %v342 = vadd.f32 %v340, %v341
        %v343 = vmul.f32 %v342, %v225
        %v344 = vsub.f32 %v333, %v343
        %v345 = vmul.f32 %v344, %v344
        %v346 = vsel %vm217, %v345, 0.0
        %v347 = vrot.slane %v346, 4
        %v348 = vadd.f32 %v346, %v347
        %v349 = vrot.slane %v348, 2
        %v350 = vadd.f32 %v348, %v349
        %v351 = vrot.slane %v350, 1
        %v352 = vadd.f32 %v350, %v351
        %v353 = vmul.f32 %v352, %v225
        %v354 = vld [vmem:[%s1 + $0x62] sm:$0x1]
        %v355 = vadd.f32 %v353, 1e-05
        %v356 = vrsqrt.pop %v355
        %v357 = vmul.f32 %v354, %v356
        %v358 = vld [vmem:[%s1 + $0x63] sm:$0x1]
        %v359 = vmul.f32 %v343, %v357
        %v360 = vsub.f32 %v358, %v359
        %v361 = vlaneseq
        %v362 = vshrl.u32 %v361, 7
        %v363 = vsub.s32 0, %v362
        %v364 = vrot.slane %v357, %v363
        %v365 = vmul.f32 %v333, %v364
        %v366 = vlaneseq
        %v367 = vshrl.u32 %v366, 7
        %v368 = vsub.s32 0, %v367
        %v369 = vrot.slane %v360, %v368
        %v370 = vadd.f32 %v365, %v369
        %v371 = vmax.f32 %v370, 0.0
        %v372 = vld [vmem:[%s1 + $0x64] sm:$0x1]
        %v373 = vld [vmem:[%s1 + $0x65] sm:$0x1]
        %375 = vset.pattern.permute.xlu0 0
        %376 = vperm.xlu0 %375, %v373
        %v377 = vpop.permute.xlu0 %376
        %v380 = vsel %vm217, %v372, 0
        %v383 = vsel %vm217, %v371, 0
        %385 = vmatprep.subr.mxu0 0.0
        %386 = vmatpush1.xpose.msra.mxu0 %v383
        %387 = vmatprep.subr.mxu0 0.0
        %388 = vmatpush1.xpose.msra.mxu0 0.0
        %389 = vmatprep.subr.mxu0 0.0
        %390 = vmatpush1.xpose.msra.mxu0 0.0
        %391 = vmatprep.subr.mxu0 0.0
        %392 = vmatpush1.xpose.msra.mxu0 0.0
        %393 = vmatprep.subr.mxu0 0.0
        %394 = vmatpush1.xpose.msra.mxu0 0.0
        %395 = vmatprep.subr.mxu0 0.0
        %396 = vmatpush1.xpose.msra.mxu0 0.0
        %397 = vmatprep.subr.mxu0 0.0
        %398 = vmatpush1.xpose.msra.mxu0 0.0
        %399 = vmatprep.subr.mxu0 0.0
        %400 = vmatpush1.xpose.msra.mxu0 0.0
        %401 = vmatprep.subr.mxu0 0.0
        %402 = vmatpush1.xpose.msra.mxu0 0.0
        %403 = vmatprep.subr.mxu0 0.0
        %404 = vmatpush1.xpose.msra.mxu0 0.0
        %405 = vmatprep.subr.mxu0 0.0
        %406 = vmatpush1.xpose.msra.mxu0 0.0
        %407 = vmatprep.subr.mxu0 0.0
        %408 = vmatpush1.xpose.msra.mxu0 0.0
        %409 = vmatprep.subr.mxu0 0.0
        %410 = vmatpush1.xpose.msra.mxu0 0.0
        %411 = vmatprep.subr.mxu0 0.0
        %412 = vmatpush1.xpose.msra.mxu0 0.0
        %413 = vmatprep.subr.mxu0 0.0
        %414 = vmatpush1.xpose.msra.mxu0 0.0
        %415 = vmatprep.subr.mxu0 0.0
        %416 = vmatpush1.xpose.msra.mxu0 0.0
        %417 = vmatprep.subr.mxu0 0.0
        %418 = vmatpush1.xpose.msra.mxu0 0.0
        %419 = vmatprep.subr.mxu0 0.0
        %420 = vmatpush1.xpose.msra.mxu0 0.0
        %421 = vmatprep.subr.mxu0 0.0
        %422 = vmatpush1.xpose.msra.mxu0 0.0
        %423 = vmatprep.subr.mxu0 0.0
        %424 = vmatpush1.xpose.msra.mxu0 0.0
        %425 = vmatprep.subr.mxu0 0.0
        %426 = vmatpush1.xpose.msra.mxu0 0.0
        %427 = vmatprep.subr.mxu0 0.0
        %428 = vmatpush1.xpose.msra.mxu0 0.0
        %429 = vmatprep.subr.mxu0 0.0
        %430 = vmatpush1.xpose.msra.mxu0 0.0
        %431 = vmatprep.subr.mxu0 0.0
        %432 = vmatpush1.xpose.msra.mxu0 0.0
        %433 = vmatprep.subr.mxu0 0.0
        %434 = vmatpush1.xpose.msra.mxu0 0.0
        %435 = vmatprep.subr.mxu0 0.0
        %436 = vmatpush1.xpose.msra.mxu0 0.0
        %437 = vmatprep.subr.mxu0 0.0
        %438 = vmatpush1.xpose.msra.mxu0 0.0
        %439 = vmatprep.subr.mxu0 0.0
        %440 = vmatpush1.xpose.msra.mxu0 0.0
        %441 = vmatprep.subr.mxu0 0.0
        %442 = vmatpush1.xpose.msra.mxu0 0.0
        %443 = vmatprep.subr.mxu0 0.0
        %444 = vmatpush1.xpose.msra.mxu0 0.0
        %445 = vmatprep.subr.mxu0 0.0
        %446 = vmatpush1.xpose.msra.mxu0 0.0
        %447 = vmatprep.subr.mxu0 0.0
        %448 = vmatpush1.xpose.msra.mxu0 0.0
        %449 = vmatprep.mubr.f32.mxu0 0.0
        %450 = vmatmul.mubr.f32.gmra.mrb[0].mxu0 %v380
        %v451 = vpop.f32.mrb[0].mxu0
        %v452 = vadd.f32 %v377, %v451
        %v453 = vpop.f32.mrb[0].mxu0
        %454 = vdwg.mxu0
        %vm455 = vcmask 57344
        %456 = vst.msk [vmem:[%s133] sm:$0x1] %vm455, %v452
        %s457 = sand.u32 %s71, 1
        %s458 = scalar_lea.sflag [#allocation3], %s457
        %s459 = sand.u32 %s71, 1
        %s460 = scalar_lea.vmem [#allocation2], %s459
        // Predicated region
        $region29: #{tpu_custom_call.1} parent=27 // pred_check
          %p461 = pneg %p81
        $region30: #{tpu_custom_call.1} parent=27 // pred_check_branch
          %463 = sbr.rel (%p461) target = $region32
        $region31: #{tpu_custom_call.1} parent=27 // pred_region
          %s465 = ssub.s32 16, 16
          %466 = vsyncadd %s458, %s465
          %s467 = smul.addr %s16, 16
          %s468 = scalar_lea.hbm %s2, %s467
          %s470 = sshll.u32 %s460, 4
          %s471 = int_to_ptr.vmem [resolvable:$true] %s470
          %473 = dma.vmem_to_hbm [thread:$0]  %s471, 16, %s468, %s458
        $region32: #{tpu_custom_call.1} parent=27 // pred_fallthru
          _
      $region28: #{tpu_custom_call.1} parent=5 // pred_fallthru
        _
      %p474 = scmp.le.s32.totalorder 2, %s11
      // Predicated region
      $region33: #{tpu_custom_call.1} parent=5 // pred_check
        %p475 = pneg %p474
      $region34: #{tpu_custom_call.1} parent=5 // pred_check_branch
        %477 = sbr.rel (%p475) target = $region36
      $region35: #{tpu_custom_call.1} parent=5 // pred_region
        %s478 = ssub.s32 %s11, 2
        // Predicated region
        $region37: #{tpu_custom_call.1} parent=35 // pred_check
          %p479 = pneg %p87
        $region38: #{tpu_custom_call.1} parent=35 // pred_check_branch
          %481 = sbr.rel (%p479) target = $region40
        $region39: #{tpu_custom_call.1} parent=35 // pred_region
          %s482 = sand.u32 %s72, 1
          %s483 = scalar_lea.sflag [#allocation3], %s482
          %s484 = sand.u32 %s72, 1
          %s485 = scalar_lea.vmem [#allocation2], %s484
          %486 = dma.done %s483, 16
        $region40: #{tpu_custom_call.1} parent=35 // pred_fallthru
          _
      $region36: #{tpu_custom_call.1} parent=5 // pred_fallthru
        _
    $region6: #{tpu_custom_call.1} parent=1 // loop_footer
      %s15 = sadd.s32 1, %s11
    $region7: #{tpu_custom_call.1} parent=1 // loop_footer_branch
      %10 = sbr.rel target = $region3
    $region8: #{tpu_custom_call.1} parent=1 // loop_exit
      _
    %487 = vsyncpa [#allocation3], 1
    %s488 = scalar_lea.sflag [#allocation3], 1
    %489 = vsyncpa %s488, 1

</llo_original>
